<compile_context>
chip_gen: v6e
topology: v6e:2x2x1
jax: 0.10.0
libtpu: 0.0.40
codegen_flags: <defaults>
</compile_context>

<pallas_src>
import jax
import jax.numpy as jnp
from jax.experimental import pallas as pl
from jax.experimental.pallas import tpu as pltpu


def _snake_beta_kernel(x_ref, p_ref, o_ref):
    # x_ref / o_ref: (TR, TT) in the I/O dtype; p_ref: (TR, 2) f32 with
    #   p[:, 0] = alpha_eff, p[:, 1] = 1 / (beta_eff + eps)  (prepped wrapper-side)
    x = x_ref[...].astype(jnp.float32)
    p = p_ref[...]
    a = p[:, 0:1]          # (TR, 1) -> broadcasts over lanes
    inv_b = p[:, 1:2]
    s = jnp.sin(x * a)     # EUP; hidden under HBM DMA for this mem-bound op
    o_ref[...] = (x + inv_b * (s * s)).astype(o_ref.dtype)


def _round_down(n, m):
    return (n // m) * m


def _pick_block(dim, align, max_elems):
    """Block size along one axis: full dim if dim <= align, else a multiple of
    `align` that never exceeds `dim`, capped at `max_elems`."""
    if dim <= align:
        return dim
    cap = max(align, _round_down(max_elems, align))
    return max(align, min(_round_down(dim, align), cap))


def snake_beta(x, alpha, beta, *, logscale=True, eps=1e-6,
               row_tile=None, lane_tile=None, tile_bytes=4 << 20):
    """x: (B, C, T); alpha, beta: (C,). Returns (B, C, T) in x.dtype."""
    B, C, T = x.shape
    R = B * C
    itemsize = jnp.dtype(x.dtype).itemsize

    # --- per-row constants, computed ONCE in the wrapper (tiny HBM traffic) ---
    a = alpha.astype(jnp.float32)
    b = beta.astype(jnp.float32)
    if logscale:
        a = jnp.exp(a)
        b = jnp.exp(b)
    inv_b = 1.0 / (b + eps)
    # row r = batch*C + c  ->  channel c
    params = jnp.stack([jnp.tile(a, B), jnp.tile(inv_b, B)], axis=1)  # (R, 2) f32

    x2 = x.reshape(R, T)  # free reshape, no copy

    # --- byte-sized, dtype-aware tile selection (blocks never exceed dims) ---
    row_align = max(8, 32 // itemsize)            # 8 (f32), 16 (bf16), 32 (int8)
    if lane_tile is None:
        lane_cap = max(128, _round_down((32 << 10) // itemsize, 128))  # <=32 KiB/row
        lane_tile = _pick_block(T, 128, lane_cap)
    if row_tile is None:
        row_budget = max(row_align, tile_bytes // (lane_tile * itemsize))
        row_tile = _pick_block(R, row_align, row_budget)

    grid_r = pl.cdiv(R, row_tile)
    grid_t = pl.cdiv(T, lane_tile)
    # v7x: both axes are "parallel" -> make sure there are >=2 blocks so both
    # TensorCores get work when the tensor is big enough to be worth splitting.
    if grid_r * grid_t == 1:
        if lane_tile >= 256:
            lane_tile = max(128, _round_down(lane_tile // 2, 128))
            grid_t = pl.cdiv(T, lane_tile)
        elif row_tile >= 2 * row_align:
            row_tile = max(row_align, _round_down(row_tile // 2, row_align))
            grid_r = pl.cdiv(R, row_tile)

    out = pl.pallas_call(
        _snake_beta_kernel,
        out_shape=jax.ShapeDtypeStruct((R, T), x.dtype),
        grid_spec=pltpu.PrefetchScalarGridSpec(
            num_scalar_prefetch=0,
            grid=(grid_r, grid_t),
            in_specs=[
                pl.BlockSpec((row_tile, lane_tile), lambda r, t: (r, t)),
                pl.BlockSpec((row_tile, 2), lambda r, t: (r, 0)),
            ],
            out_specs=pl.BlockSpec((row_tile, lane_tile), lambda r, t: (r, t)),
        ),
        compiler_params=pltpu.CompilerParams(
            dimension_semantics=("parallel", "parallel"),
            # ~16 MiB actually needed at 4 MiB tiles; 48 MiB stays under v7x's
            # 64 MiB physical VMEM and lifts v5e's 16 MiB scoped default.
            vmem_limit_bytes=48 << 20,
        ),
    )(x2, params)

    return out.reshape(B, C, T)


def snake_beta_ref(x, alpha, beta, *, logscale=True, eps=1e-6):
    a = alpha[None, :, None].astype(jnp.float32)
    b = beta[None, :, None].astype(jnp.float32)
    if logscale:
        a = jnp.exp(a)
        b = jnp.exp(b)
    xf = x.astype(jnp.float32)
    return xf + 1.0 / (b + eps) * jnp.sin(xf * a) ** 2


if __name__ == "__main__":
    key = jax.random.PRNGKey(0)
    kx, ka, kb, kx2, ka2, kb2, kx3, ka3, kb3 = jax.random.split(key, 9)

    # --- Test 1: module-spec small shape (B=2, C=4, T=16), f32, logscale=True ---
    B, C, T = 2, 4, 16
    x = jax.random.normal(kx, (B, C, T), dtype=jnp.float32)
    alpha = 0.1 * jax.random.normal(ka, (C,), dtype=jnp.float32)
    beta = 0.1 * jax.random.normal(kb, (C,), dtype=jnp.float32)
    out = jax.block_until_ready(snake_beta(x, alpha, beta, logscale=True, eps=1e-6))
    ref = snake_beta_ref(x, alpha, beta, logscale=True, eps=1e-6)
    assert out.shape == (B, C, T) and out.dtype == x.dtype
    assert jnp.allclose(out, ref, atol=1e-5, rtol=1e-5)

    # --- Test 2: ragged shape (boundary blocks on both axes), logscale=False ---
    B2, C2, T2 = 2, 13, 300
    x2 = jax.random.normal(kx2, (B2, C2, T2), dtype=jnp.float32)
    alpha2 = 1.0 + 0.1 * jax.random.normal(ka2, (C2,), dtype=jnp.float32)
    beta2 = 0.5 + jnp.abs(jax.random.normal(kb2, (C2,), dtype=jnp.float32))
    out2 = jax.block_until_ready(snake_beta(x2, alpha2, beta2, logscale=False))
    ref2 = snake_beta_ref(x2, alpha2, beta2, logscale=False)
    assert jnp.allclose(out2, ref2, atol=1e-5, rtol=1e-5)

    # --- Test 3: bf16 I/O, multi-block grid (exercises dtype-aware tiling) ---
    B3, C3, T3 = 2, 64, 1024
    x3 = jax.random.normal(kx3, (B3, C3, T3), dtype=jnp.bfloat16)
    alpha3 = 0.1 * jax.random.normal(ka3, (C3,), dtype=jnp.float32)
    beta3 = 0.1 * jax.random.normal(kb3, (C3,), dtype=jnp.float32)
    out3 = jax.block_until_ready(snake_beta(x3, alpha3, beta3))
    ref3 = snake_beta_ref(x3.astype(jnp.float32), alpha3, beta3)
    assert out3.dtype == jnp.bfloat16
    assert jnp.allclose(out3.astype(jnp.float32), ref3, atol=0.05, rtol=0.05)

    print("KERNEL_OK")
</pallas_src>

<mosaic_0001>
module attributes {stable_mosaic.version = 11 : i64} {
  func.func @_snake_beta_kernel(%arg0: i32, %arg1: i32, %arg2: memref<8x16xf32, #tpu.memory_space<vmem>>, %arg3: memref<8x2xf32, #tpu.memory_space<vmem>>, %arg4: memref<8x16xf32, #tpu.memory_space<vmem>>) attributes {dimension_semantics = [#tpu.dimension_semantics<parallel>, #tpu.dimension_semantics<parallel>], iteration_bounds = array<i64: 1, 1>, scalar_prefetch = 0 : i64, scratch_operands = 0 : i64, tpu.core_type = #tpu.core_type<tc>, window_params = [{transform_indices = @transform_0, window_bounds = array<i64: 8, 16>}, {transform_indices = @transform_1, window_bounds = array<i64: 8, 2>}, {transform_indices = @transform_2, window_bounds = array<i64: 8, 16>}]} {
    %c0 = arith.constant 0 : index
    %c0_0 = arith.constant 0 : index
    %0 = vector.load %arg2[%c0, %c0_0] : memref<8x16xf32, #tpu.memory_space<vmem>>, vector<8x16xf32>
    %c0_1 = arith.constant 0 : index
    %c0_2 = arith.constant 0 : index
    %1 = vector.load %arg3[%c0_1, %c0_2] : memref<8x2xf32, #tpu.memory_space<vmem>>, vector<8x2xf32>
    %2 = vector.extract_strided_slice %1 {offsets = [0, 0], sizes = [8, 1], strides = [1, 1]} : vector<8x2xf32> to vector<8x1xf32>
    %3 = vector.extract_strided_slice %1 {offsets = [0, 1], sizes = [8, 1], strides = [1, 1]} : vector<8x2xf32> to vector<8x1xf32>
    %4 = vector.broadcast %2 : vector<8x1xf32> to vector<8x16xf32>
    %5 = arith.mulf %0, %4 : vector<8x16xf32>
    %6 = math.sin %5 : vector<8x16xf32>
    %7 = arith.mulf %6, %6 : vector<8x16xf32>
    %8 = vector.broadcast %3 : vector<8x1xf32> to vector<8x16xf32>
    %9 = arith.mulf %8, %7 : vector<8x16xf32>
    %10 = arith.addf %0, %9 : vector<8x16xf32>
    %c0_3 = arith.constant 0 : index
    %c0_4 = arith.constant 0 : index
    %11 = vector.load %arg4[%c0_3, %c0_4] : memref<8x16xf32, #tpu.memory_space<vmem>>, vector<8x16xf32>
    tpu.vector_store %arg4[%c0_3, %c0_4], %10 {strides = array<i32>} : memref<8x16xf32, #tpu.memory_space<vmem>>, vector<8x16xf32>,
    return
  }
  func.func @transform_0(%arg0: i32, %arg1: i32) -> (i32, i32) {
    %c0_i32 = arith.constant 0 : i32
    return %arg0, %arg1 : i32, i32
  }
  func.func @transform_1(%arg0: i32, %arg1: i32) -> (i32, i32) {
    %c0_i32 = arith.constant 0 : i32
    %c0_i32_0 = arith.constant 0 : i32
    return %arg0, %c0_i32 : i32, i32
  }
  func.func @transform_2(%arg0: i32, %arg1: i32) -> (i32, i32) {
    %c0_i32 = arith.constant 0 : i32
    return %arg0, %arg1 : i32, i32
  }
}

</mosaic_0001>

<llo_original>
// kernel: tpu_custom_call.1
$region0: #{tpu_custom_call.1}
  #allocation0 [shape = 'u32[]', space=smem, size = 0x4, offset = 0x4, fixed_abs, tag = 'smem constant byte address 0x4 - core index']
  #allocation1 [shape = 'u32[144,128]{1,0:T(1,128)}', space=vmem, size = 0x12000, scoped, tag = 'internal scratch']
  %s0 = inlined_call_operand.vmem [shape: f32[8,16], index: 0, kind: input, shape index: {}]
  %s1 = inlined_call_operand.vmem [shape: f32[8,2], index: 1, kind: input, shape index: {}]
  %s2 = inlined_call_operand.hbm [shape: f32[8,16], index: 2, kind: output, shape index: {}]
  %s3 = sld [smem:[#allocation0]]
  $region18: #{tpu_custom_call.1} parent=0
    _
  %s5 = ssub.s32 1, %s3
  %s6 = scalar_select 0, %s5, %s3
  $region1: #{tpu_custom_call.1} parent=0
    #allocation2 [shape = 'u8[4096]{0}', space=vmem, size = 0x1000, scoped, tag = 'output window, operand 0, single buffered']
    #allocation3 [shape = 's32[1]{0}', space=sflag, size = 0x4, scoped, tag = 'scoped memory for tpu_custom_call.1']
    %7 = vsyncpa [#allocation3], 0
    // Predicated region
    $region2: #{tpu_custom_call.1} parent=1 // pred_check
      _
    $region3: #{tpu_custom_call.1} parent=1 // pred_check_branch
      %9 = sbr.rel (0) target = $region5
    $region4: #{tpu_custom_call.1} parent=1 // pred_region
      _
    $region5: #{tpu_custom_call.1} parent=1 // pred_fallthru
      _
    // Predicated region
    $region6: #{tpu_custom_call.1} parent=1 // pred_check
      _
    $region7: #{tpu_custom_call.1} parent=1 // pred_check_branch
      %11 = sbr.rel (0) target = $region9
    $region8: #{tpu_custom_call.1} parent=1 // pred_region
      _
    $region9: #{tpu_custom_call.1} parent=1 // pred_fallthru
      _
    %v12 = vld [vmem:[%s0] sm:$0xff]
    %v13 = vld [vmem:[%s1] sm:$0xff]
    %15 = vset.pattern.permute.xlu0 0
    %16 = vperm.xlu0 %15, %v13
    %v17 = vpop.permute.xlu0 %16
    %v19 = vmul.f32 %v12, %v17
    %v20 = vand.u32 2147483647, %v19
    %vm21 = vcmp.le.f32.partialorder %v20, 0.7853982
    %vm22 = vcmp.lt.s32.totalorder %v19, 0
    %v23 = vand.u32 %v19, 2139095040
    %v24 = vshrl.u32 %v23, 23
    %v25 = vsub.s32 %v24, 127
    %v26 = vand.u32 2147483647, %v19
    %v27 = vand.u32 %v26, 8388607
    %v28 = vor.u32 %v27, 8388608
    %v29 = vsub.s32 0, %v28
    %v30 = vadd.s32 %v25, 1
    %vm31 = vcmp.gt.s32.totalorder %v30, 0
    %v32 = vsel %vm31, %v30, 0
    %v33 = vshrl.u32 %v32, 5
    %v34 = vand.u32 %v32, 31
    %v35 = vsub.s32 32, %v34
    %v36 = vshrl.u32 683565275, %v35
    %v37 = vshll.u32 683565275, %v34
    %v38 = vshrl.u32 2475754826, %v35
    %v39 = vor.u32 %v37, %v38
    %v40 = vshll.u32 2475754826, %v34
    %v41 = vshrl.u32 2131351028, %v35
    %v42 = vor.u32 %v40, %v41
    %v43 = vshll.u32 2131351028, %v34
    %v44 = vshrl.u32 2102212464, %v35
    %v45 = vor.u32 %v43, %v44
    %v46 = vshll.u32 2102212464, %v34
    %v47 = vshrl.u32 920167782, %v35
    %v48 = vor.u32 %v46, %v47
    %v49 = vshll.u32 920167782, %v34
    %v50 = vshrl.u32 1326507024, %v35
    %v51 = vor.u32 %v49, %v50
    %vm52 = vcmp.lt.s32.totalorder %v33, 1
    %vm53 = vcmp.lt.s32.totalorder %v33, 2
    %vm54 = vcmp.lt.s32.totalorder %v33, 3
    %vm55 = vcmp.lt.s32.totalorder %v33, 4
    %v56 = vsel %vm52, %v36, %v39
    %v57 = vsel %vm55, %v45, 2102212464
    %v58 = vsel %vm54, %v42, %v57
    %v59 = vsel %vm53, %v56, %v58
    %v60 = vsel %vm52, %v39, %v42
    %v61 = vsel %vm55, %v48, 920167782
    %v62 = vsel %vm54, %v45, %v61
    %v63 = vsel %vm53, %v60, %v62
    %v64 = vsel %vm52, %v42, %v45
    %v65 = vsel %vm55, %v51, 1326507024
    %v66 = vsel %vm54, %v48, %v65
    %v67 = vsel %vm53, %v64, %v66
    %v68 = vshll.u32 %v28, 8
    %v69 = vmul.u32.u64.compose %v68, %v67
    %v70 = vextract.low.u32 %v69
    %v71 = vextract.high.u32 %v69
    %v72 = vmul.u32.u64.compose %v68, %v63
    %v73 = vextract.low.u32 %v72
    %v74 = vextract.high.u32 %v72
    %v75 = vmul.u32 %v68, %v59
    %v76 = vadd.s32 %v71, %v73
    %vm77 = vc.u32 %v71, %v73
    %v78 = vadd.s32 %v74, 1
    %v79 = vsel %vm77, %v78, %v74
    %v80 = vadd.s32 %v75, %v79
    %v81 = vadd.s32 %v80, 536870912
    %v82 = vshrl.u32 %v81, 30
    %v83 = vshll.u32 %v82, 30
    %v84 = vsub.s32 %v80, %v83
    %vm85 = vcmp.lt.s32.totalorder %v84, 0
    %v86 = vsub.s32 0, %v84
    %v87 = vsel %vm85, %v86, %v84
    %v88 = vclz %v87
    %v89 = vsub.s32 %v88, 2
    %vm90 = vcmp.gt.s32.totalorder 0, %v89
    %v91 = vsel %vm90, 0, %v89
    %v92 = vsub.s32 32, %v91
    %v93 = vshll.u32 %v84, %v91
    %v94 = vshrl.u32 %v76, %v92
    %v95 = vor.u32 %v93, %v94
    %v96 = vsub.s32 4294967266, %v91
    %v97 = vadd.s32 %v96, 127
    %v98 = vshll.u32 %v97, 23
    %v99 = vor.u32 4788187, %v98
    %v100 = vand.u32 2147483647, %v99
    %v102 = vcvt.s32.f32 %v95
    %v103 = vmul.f32 %v102, %v100
    %v104 = vxor.u32 %v103, 2147483648
    %v105 = vsel %vm22, %v104, %v103
    %v106 = vsub.s32 4, %v82
    %v107 = vsel %vm22, %v106, %v82
    %v108 = vsel %vm21, %v19, %v105
    %v109 = vsel %vm21, 0, %v107
    %v110 = vcosq.f32.pop %v108
    %v111 = vsinq.f32.pop %v108
    %vm112 = vweird.f32 %v19
    %v113 = vadd.s32 %v109, 3
    %v114 = vand.u32 %v113, 3
    %vm115 = vcmp.lt.s32.totalorder %v114, 2
    %vm116 = vcmp.eq.s32.totalorder %v114, 0
    %v117 = vxor.u32 %v111, 2147483648
    %v118 = vsel %vm116, %v110, %v117
    %vm119 = vcmp.eq.s32.totalorder %v114, 2
    %v120 = vxor.u32 %v110, 2147483648
    %v121 = vsel %vm119, %v120, %v111
    %v122 = vsel %vm115, %v118, %v121
    %v123 = vsel %vm112, nan, %v122
    %v124 = vmul.f32 %v123, %v123
    %125 = vset.pattern.permute.xlu0 1
    %126 = vperm.xlu0 %125, %v13
    %v127 = vpop.permute.xlu0 %126
    %v129 = vmul.f32 %v127, %v124
    %v130 = vadd.f32 %v12, %v129
    %vm131 = vcmask 130048
    %132 = vst.msk [vmem:[#allocation2] sm:$0xff] %vm131, %v130
    // Predicated region
    $region10: #{tpu_custom_call.1} parent=1 // pred_check
      _
    $region11: #{tpu_custom_call.1} parent=1 // pred_check_branch
      %134 = sbr.rel (0) target = $region13
    $region12: #{tpu_custom_call.1} parent=1 // pred_region
      %s136 = ssub.s32 128, 128
      %137 = vsyncadd [#allocation3], %s136
      %s139 = sshll.u32 [#allocation2], 4
      %s140 = int_to_ptr.vmem [resolvable:$true] %s139
      %142 = dma.vmem_to_hbm [thread:$0]  %s140, 128, %s2, [#allocation3]
    $region13: #{tpu_custom_call.1} parent=1 // pred_fallthru
      _
    // Predicated region
    $region14: #{tpu_custom_call.1} parent=1 // pred_check
      _
    $region15: #{tpu_custom_call.1} parent=1 // pred_check_branch
      %144 = sbr.rel (0) target = $region17
    $region16: #{tpu_custom_call.1} parent=1 // pred_region
      %145 = dma.done [#allocation3], 128
    $region17: #{tpu_custom_call.1} parent=1 // pred_fallthru
      _
    %146 = vsyncpa [#allocation3], 1

</llo_original>
